<compile_context>
chip_gen: v5e
topology: v5e:2x2
jax: 0.10.0
libtpu: 0.0.40
codegen_flags: <defaults>
</compile_context>

<pallas_src>
import jax
import jax.numpy as jnp
from jax.experimental import pallas as pl
from jax.experimental.pallas import tpu as pltpu


_LANE = 128
# Conservative per-step working-set budget: fits the 16 MiB default scoped
# VMEM on v5e and the 32 MiB default on v6e/v7x (64 MiB physical on v7x).
_VMEM_WORKING_SET_BUDGET = 24 * 1024 * 1024
_VMEM_LIMIT_BYTES = 32 * 1024 * 1024


def _self_expressive_kernel(coef_ref, z_ref, zc_ref):
    # coef_ref: (B, B)  full Coef matrix (constant block index -> loaded once)
    # z_ref   : (B, TD) tile of the flattened latent along the lane axis
    # zc_ref  : (B, TD) corresponding output tile
    zc_ref[...] = jnp.dot(
        coef_ref[...], z_ref[...], preferred_element_type=jnp.float32
    ).astype(zc_ref.dtype)


def _choose_tile_d(d_padded, b, itemsize):
    """Largest lane-aligned divisor of d_padded whose double-buffered working
    set fits the VMEM budget, preferring >= 2 grid steps when D allows it."""
    assert d_padded % _LANE == 0
    coef_bytes = b * b * 4
    candidates = [t for t in range(d_padded, 0, -_LANE) if d_padded % t == 0]
    for t in candidates:
        working_set = 4 * b * t * itemsize + coef_bytes  # 2x in + 2x out bufs
        if working_set > _VMEM_WORKING_SET_BUDGET:
            continue
        if (d_padded // t) < 2 and d_padded >= 2 * _LANE:
            continue  # insist on >= 2 grid steps whenever D allows it
        return t
    return _LANE


def self_expressive_forward(latent, coef, *, tile_d=None):
    """Returns (z, z_c, Coef) matching the PyTorch module's forward."""
    b = coef.shape[0]
    z = latent.reshape(b, -1)  # glue: flatten in plain JAX (same as torch)
    d = z.shape[1]
    out_dtype = z.dtype

    # Pad D up to a lane multiple so every tile/store is 128-aligned.
    d_padded = ((d + _LANE - 1) // _LANE) * _LANE
    z_in = z if d_padded == d else jnp.pad(z, ((0, 0), (0, d_padded - d)))

    itemsize = jnp.dtype(z_in.dtype).itemsize
    if tile_d is None:
        tile_d = _choose_tile_d(d_padded, b, itemsize)
    assert d_padded % tile_d == 0
    grid = (d_padded // tile_d,)

    cost = pl.CostEstimate(
        flops=2 * b * b * d_padded,
        transcendentals=0,
        bytes_accessed=b * b * 4 + 2 * b * d_padded * itemsize,
    )

    # TODO(synk): for very large B (Coef ~ B^2*4 bytes no longer fits scoped
    # VMEM, e.g. B >~ 2500) add a contraction-tiled path with a VMEM f32
    # accumulator and pl.when init/finalize; not needed at module-typical B.
    z_c = pl.pallas_call(
        _self_expressive_kernel,
        out_shape=jax.ShapeDtypeStruct((b, d_padded), out_dtype),
        grid_spec=pltpu.PrefetchScalarGridSpec(
            num_scalar_prefetch=0,
            grid=grid,
            in_specs=[
                pl.BlockSpec((b, b), lambda j: (0, 0)),        # Coef: full, reused
                pl.BlockSpec((b, tile_d), lambda j: (0, j)),   # z tile along D
            ],
            out_specs=pl.BlockSpec((b, tile_d), lambda j: (0, j)),
        ),
        compiler_params=pltpu.CompilerParams(
            dimension_semantics=("parallel",),
            vmem_limit_bytes=_VMEM_LIMIT_BYTES,
        ),
        cost_estimate=cost,
    )(coef, z_in)

    if d_padded != d:
        z_c = z_c[:, :d]

    return z, z_c, coef


if __name__ == "__main__":
    # Small shapes consistent with the module: batch=8, C=4, H=W=16 -> D=1024.
    batch_size, C, H, W = 8, 4, 16, 16

    key = jax.random.PRNGKey(0)
    latent = jax.random.normal(key, (batch_size, C, H, W), dtype=jnp.float32)

    # Deterministic parameter init exactly as in __init__: 1e-8 * ones(B, B).
    coef = 1e-08 * jnp.ones((batch_size, batch_size), dtype=jnp.float32)

    z, z_c, coef_out = self_expressive_forward(latent, coef)
    jax.block_until_ready((z, z_c, coef_out))

    # Correctness check against a plain JAX reference.
    z_ref = latent.reshape(batch_size, -1)
    zc_ref = coef @ z_ref
    assert z.shape == (batch_size, C * H * W)
    assert z_c.shape == (batch_size, C * H * W)
    assert coef_out.shape == (batch_size, batch_size)
    assert z_c.dtype == z.dtype
    assert jnp.allclose(z, z_ref)
    assert jnp.allclose(z_c, zc_ref, atol=1e-6, rtol=1e-6)

    print("KERNEL_OK")
</pallas_src>

<mosaic_0001>
module attributes {stable_mosaic.version = 11 : i64} {
  func.func @_self_expressive_kernel(%arg0: i32, %arg1: memref<8x8xf32, #tpu.memory_space<vmem>>, %arg2: memref<8x512xf32, #tpu.memory_space<vmem>>, %arg3: memref<8x512xf32, #tpu.memory_space<vmem>>) attributes {dimension_semantics = [#tpu.dimension_semantics<parallel>], iteration_bounds = array<i64: 2>, scalar_prefetch = 0 : i64, scratch_operands = 0 : i64, tpu.core_type = #tpu.core_type<tc>, window_params = [{pipeline_mode = #tpu.pipeline_mode<synchronous>, transform_indices = @transform_0, window_bounds = array<i64: 8, 8>}, {transform_indices = @transform_1, window_bounds = array<i64: 8, 512>}, {transform_indices = @transform_2, window_bounds = array<i64: 8, 512>}]} {
    %c0 = arith.constant 0 : index
    %c0_0 = arith.constant 0 : index
    %0 = vector.load %arg1[%c0, %c0_0] : memref<8x8xf32, #tpu.memory_space<vmem>>, vector<8x8xf32>
    %c0_1 = arith.constant 0 : index
    %c0_2 = arith.constant 0 : index
    %1 = vector.load %arg2[%c0_1, %c0_2] : memref<8x512xf32, #tpu.memory_space<vmem>>, vector<8x512xf32>
    %cst = arith.constant dense<0.000000e+00> : vector<8x512xf32>
    %2 = tpu.matmul %0, %1, %cst {dimension_numbers = #tpu.dot_dimension_numbers<[1], [0], [0], [1], [0, 0, 1, 1], [], []>} : vector<8x8xf32>, vector<8x512xf32>, vector<8x512xf32> -> vector<8x512xf32>
    %c0_3 = arith.constant 0 : index
    %c0_4 = arith.constant 0 : index
    %3 = vector.load %arg3[%c0_3, %c0_4] : memref<8x512xf32, #tpu.memory_space<vmem>>, vector<8x512xf32>
    tpu.vector_store %arg3[%c0_3, %c0_4], %2 {strides = array<i32>} : memref<8x512xf32, #tpu.memory_space<vmem>>, vector<8x512xf32>,
    return
  }
  func.func @transform_0(%arg0: i32) -> (i32, i32) {
    %c0_i32 = arith.constant 0 : i32
    %c0_i32_0 = arith.constant 0 : i32
    %c0_i32_1 = arith.constant 0 : i32
    return %c0_i32, %c0_i32_0 : i32, i32
  }
  func.func @transform_1(%arg0: i32) -> (i32, i32) {
    %c0_i32 = arith.constant 0 : i32
    %c0_i32_0 = arith.constant 0 : i32
    return %c0_i32, %arg0 : i32, i32
  }
  func.func @transform_2(%arg0: i32) -> (i32, i32) {
    %c0_i32 = arith.constant 0 : i32
    %c0_i32_0 = arith.constant 0 : i32
    return %c0_i32, %arg0 : i32, i32
  }
}

</mosaic_0001>

<llo_original>
// kernel: tpu_custom_call.1
$region0: #{tpu_custom_call.1}
  #allocation0 [shape = 'u32[]', space=smem, size = 0x4, offset = 0x4, fixed_abs, tag = 'smem constant byte address 0x4 - core index']
  #allocation1 [shape = 'u32[72,128]{1,0:T(1,128)}', space=vmem, size = 0x9000, scoped, tag = 'internal scratch']
  %s0 = inlined_call_operand.hbm [shape: f32[8,8], index: 0, kind: input, shape index: {}]
  %s1 = inlined_call_operand.hbm [shape: f32[8,1024], index: 1, kind: input, shape index: {}]
  %s2 = inlined_call_operand.hbm [shape: f32[8,1024], index: 2, kind: output, shape index: {}]
  %s3 = sld [smem:[#allocation0]]
  $region49: #{tpu_custom_call.1} parent=0
    _
  %s5 = ssub.s32 1, %s3
  %s6 = scalar_select 0, %s5, %s3
  $region1: #{tpu_custom_call.1} parent=0
    #allocation2 [shape = 'u8[4096]{0}', space=vmem, size = 0x1000, scoped, tag = 'input window, operand 0, single buffered']
    #allocation3 [shape = 's32[2]{0}', space=sflag, size = 0x8, scoped, tag = 'scoped memory for tpu_custom_call.1']
    #allocation4 [shape = 's32[2]{0}', space=sflag, size = 0x8, scoped, tag = 'scoped memory for tpu_custom_call.1']
    #allocation5 [shape = 'u8[32768]{0}', space=vmem, size = 0x8000, scoped, tag = 'input window, operand 1']
    #allocation6 [shape = 's32[2]{0}', space=sflag, size = 0x8, scoped, tag = 'scoped memory for tpu_custom_call.1']
    #allocation7 [shape = 'u8[32768]{0}', space=vmem, size = 0x8000, scoped, tag = 'output window, operand 0']
    %7 = vsyncpa [#allocation3], 0
    %8 = vsyncpa [#allocation6], 0
    %s9 = scalar_lea.sflag [#allocation6], 1
    %10 = vsyncpa %s9, 0
    %11 = vsyncpa [#allocation4], 0
    %s12 = scalar_lea.sflag [#allocation4], 1
    %13 = vsyncpa %s12, 0
    loop: start=0, step=1, limit=4
    $region2: #{tpu_custom_call.1} parent=1 // loop_pre_header
      _
    $region3: #{tpu_custom_call.1} parent=1 // loop_header
      %s15 = sphi 0, %s19
      %p16 = scmp.ge.s32.totalorder %s15, 4
      %s23 = sphi 0, %s23
      %s25 = sphi 0, %s23
      %s26 = sphi 0, %s25
      %s40 = sphi 0, %s26
      %s46 = sphi 0, %s48
      %s49 = sphi 0, %s46
      %s50 = sphi 0, %s49
      %s66 = sphi 0, %s50
      %s72 = sphi 0, %s74
      %s75 = sphi 0, %s72
      %s76 = sphi 0, %s75
      %s92 = sphi 0, %s76
    $region4: #{tpu_custom_call.1} parent=1 // loop_header_branch
      %18 = sbr.rel (%p16) target = $region8
    $region5: #{tpu_custom_call.1} parent=1 // loop_body
      %s20 = ssub.s32 %s15, 1
      %s21 = ssub.s32 %s15, 2
      %s22 = sadd.s32 %s15, 1
      %s24 = sadd.s32 %s23, 1
      %p27 = scmp.eq.s32.totalorder %s15, 1
      %p28 = scmp.ne.s32.totalorder %s23, %s25
      %p29 = scmp.eq.s32.totalorder %s15, 0
      %p30 = por %p28, %p29
      %p31 = scmp.ne.s32.totalorder %s23, %s25
      %p32 = scmp.eq.s32.totalorder %s20, 1
      %p33 = por %p31, %p32
      %p34 = scmp.ne.s32.totalorder %s25, %s26
      %p35 = scmp.eq.s32.totalorder %s20, 0
      %p36 = por %p34, %p35
      %p37 = scmp.ne.s32.totalorder %s25, %s26
      %p38 = scmp.eq.s32.totalorder %s21, 1
      %p39 = por %p37, %p38
      %p41 = scmp.ne.s32.totalorder %s26, %s40
      %p42 = scmp.eq.s32.totalorder %s21, 0
      %p43 = por %p41, %p42
      %s44 = ssub.s32 %s15, %s22
      %p45 = scmp.eq.s32.totalorder %s44, 0
      %s47 = sadd.s32 %s46, 1
      %s48 = scalar_select %p45, %s46, %s47
      %p51 = pneg %p45
      %p52 = scmp.eq.s32.totalorder %s15, 1
      %p53 = por %p51, %p52
      %p54 = scmp.ne.s32.totalorder %s46, %s49
      %p55 = scmp.eq.s32.totalorder %s15, 0
      %p56 = por %p54, %p55
      %p57 = scmp.ne.s32.totalorder %s46, %s49
      %p58 = scmp.eq.s32.totalorder %s20, 1
      %p59 = por %p57, %p58
      %p60 = scmp.ne.s32.totalorder %s49, %s50
      %p61 = scmp.eq.s32.totalorder %s20, 0
      %p62 = por %p60, %p61
      %p63 = scmp.ne.s32.totalorder %s49, %s50
      %p64 = scmp.eq.s32.totalorder %s21, 1
      %p65 = por %p63, %p64
      %p67 = scmp.ne.s32.totalorder %s50, %s66
      %p68 = scmp.eq.s32.totalorder %s21, 0
      %p69 = por %p67, %p68
      %s70 = ssub.s32 %s15, %s22
      %p71 = scmp.eq.s32.totalorder %s70, 0
      %s73 = sadd.s32 %s72, 1
      %s74 = scalar_select %p71, %s72, %s73
      %p77 = pneg %p71
      %p78 = scmp.eq.s32.totalorder %s15, 1
      %p79 = por %p77, %p78
      %p80 = scmp.ne.s32.totalorder %s72, %s75
      %p81 = scmp.eq.s32.totalorder %s15, 0
      %p82 = por %p80, %p81
      %p83 = scmp.ne.s32.totalorder %s72, %s75
      %p84 = scmp.eq.s32.totalorder %s20, 1
      %p85 = por %p83, %p84
      %p86 = scmp.ne.s32.totalorder %s75, %s76
      %p87 = scmp.eq.s32.totalorder %s20, 0
      %p88 = por %p86, %p87
      %p89 = scmp.ne.s32.totalorder %s75, %s76
      %p90 = scmp.eq.s32.totalorder %s21, 1
      %p91 = por %p89, %p90
      %p93 = scmp.ne.s32.totalorder %s76, %s92
      %p94 = scmp.eq.s32.totalorder %s21, 0
      %p95 = por %p93, %p94
      %p96 = scmp.le.s32.totalorder 1, %s15
      %p97 = scmp.lt.s32.totalorder %s15, 3
      %p98 = pnand %p96, %p97
      %p99 = pneg %p98
      // Predicated region
      $region9: #{tpu_custom_call.1} parent=5 // pred_check
        _
      $region10: #{tpu_custom_call.1} parent=5 // pred_check_branch
        %101 = sbr.rel (%p98) target = $region12
      $region11: #{tpu_custom_call.1} parent=5 // pred_region
        %s102 = ssub.s32 %s15, 1
        // Predicated region
        $region13: #{tpu_custom_call.1} parent=11 // pred_check
          %p103 = pneg %p36
        $region14: #{tpu_custom_call.1} parent=11 // pred_check_branch
          %105 = sbr.rel (%p103) target = $region16
        $region15: #{tpu_custom_call.1} parent=11 // pred_region
          %107 = vsyncadd [#allocation3], 0
          %s109 = sshll.u32 %s0, 4
          %s110 = int_to_ptr.hbm [resolvable:$true] %s109
          %s111 = sshll.u32 [#allocation2], 4
          %s112 = int_to_ptr.vmem [resolvable:$true] %s111
          %114 = dma.hbm_to_vmem [thread:$0]  %s110, 128, %s112, [#allocation3]
        $region16: #{tpu_custom_call.1} parent=11 // pred_fallthru
          _
      $region12: #{tpu_custom_call.1} parent=5 // pred_fallthru
        _
      %p115 = scmp.lt.s32.totalorder %s15, 2
      // Predicated region
      $region17: #{tpu_custom_call.1} parent=5 // pred_check
        %p116 = pneg %p115
      $region18: #{tpu_custom_call.1} parent=5 // pred_check_branch
        %118 = sbr.rel (%p116) target = $region20
      $region19: #{tpu_custom_call.1} parent=5 // pred_region
        // Predicated region
        $region21: #{tpu_custom_call.1} parent=19 // pred_check
          %p119 = pneg %p56
        $region22: #{tpu_custom_call.1} parent=19 // pred_check_branch
          %121 = sbr.rel (%p119) target = $region24
        $region23: #{tpu_custom_call.1} parent=19 // pred_region
          %s122 = sand.u32 %s46, 1
          %s123 = scalar_lea.sflag [#allocation6], %s122
          %s124 = sand.u32 %s46, 1
          %s125 = smul.addr %s124, 32
          %s126 = scalar_lea.vmem [#allocation5], %s125
          %s127 = smul.u32 4, %s15
          %129 = vsyncadd %s123, 0
          %s130 = smul.addr %s127, 8
          %s131 = scalar_lea.hbm %s1, %s130
          %s133 = sshll.u32 %s131, 4
          %s134 = int_to_ptr.hbm [resolvable:$true] %s133
          %s135 = sshll.u32 %s126, 4
          %s136 = int_to_ptr.vmem [resolvable:$true] %s135
          %138 = dma.hbm_to_vmem [thread:$0]  %s134, 512, %s136, %s123
        $region24: #{tpu_custom_call.1} parent=19 // pred_fallthru
          _
      $region20: #{tpu_custom_call.1} parent=5 // pred_fallthru
        _
      %p139 = scmp.le.s32.totalorder 1, %s15
      %p140 = scmp.lt.s32.totalorder %s15, 3
      %p141 = pnand %p139, %p140
      %p142 = pneg %p141
      // Predicated region
      $region25: #{tpu_custom_call.1} parent=5 // pred_check
        _
      $region26: #{tpu_custom_call.1} parent=5 // pred_check_branch
        %144 = sbr.rel (%p141) target = $region28
      $region27: #{tpu_custom_call.1} parent=5 // pred_region
        %s145 = ssub.s32 %s15, 1
        // Predicated region
        $region29: #{tpu_custom_call.1} parent=27 // pred_check
          %p146 = pneg %p36
        $region30: #{tpu_custom_call.1} parent=27 // pred_check_branch
          %148 = sbr.rel (%p146) target = $region32
        $region31: #{tpu_custom_call.1} parent=27 // pred_region
          %150 = dma.done [#allocation3], 128
        $region32: #{tpu_custom_call.1} parent=27 // pred_fallthru
          _
        %s151 = sand.u32 %s49, 1
        %s152 = scalar_lea.sflag [#allocation6], %s151
        %s153 = sand.u32 %s49, 1
        %s154 = smul.addr %s153, 32
        %s155 = scalar_lea.vmem [#allocation5], %s154
        // Predicated region
        $region33: #{tpu_custom_call.1} parent=27 // pred_check
          %p156 = pneg %p62
        $region34: #{tpu_custom_call.1} parent=27 // pred_check_branch
          %158 = sbr.rel (%p156) target = $region36
        $region35: #{tpu_custom_call.1} parent=27 // pred_region
          %160 = dma.done %s152, 512
        $region36: #{tpu_custom_call.1} parent=27 // pred_fallthru
          _
        %p161 = pneg %p36
        %p162 = pneg %p33
        %s163 = sand.u32 %s49, 1
        %s164 = scalar_lea.sflag [#allocation6], %s163
        %s165 = sand.u32 %s49, 1
        %s166 = smul.addr %s165, 32
        %s167 = scalar_lea.vmem [#allocation5], %s166
        %p168 = pneg %p62
        %p169 = pneg %p59
        %p170 = pneg %p88
        %p171 = pneg %p85
        %s172 = sand.u32 %s75, 1
        %s173 = scalar_lea.sflag [#allocation4], %s172
        %s174 = sand.u32 %s75, 1
        %s175 = smul.addr %s174, 32
        %s176 = scalar_lea.vmem [#allocation7], %s175
        %s177 = smul.u32 4, %s20
        %s178 = smul.u32 4, %s20
        %v179 = vld [vmem:[#allocation2] sm:$0xff]
        %v180 = vld [vmem:[%s155] sm:$0xff]
        %v181 = vld [vmem:[%s155 + $0x8] sm:$0xff]
        %v182 = vld [vmem:[%s155 + $0x10] sm:$0xff]
        %v183 = vld [vmem:[%s155 + $0x18] sm:$0xff]
        %vm184 = vcmask 64512
        %v186 = vsel %vm184, %v179, 0
        %188 = vmatpush.msra.mxu0 0.0
        %189 = vmatpush.msra.mxu0 0.0
        %190 = vmatpush.msra.mxu0 0.0
        %191 = vmatpush.msra.mxu0 0.0
        %192 = vmatpush.msra.mxu0 0.0
        %193 = vmatpush.msra.mxu0 0.0
        %194 = vmatpush.msra.mxu0 0.0
        %195 = vmatpush.msra.mxu0 0.0
        %196 = vmatpush.msra.mxu0 0.0
        %197 = vmatpush.msra.mxu0 0.0
        %198 = vmatpush.msra.mxu0 0.0
        %199 = vmatpush.msra.mxu0 0.0
        %200 = vmatpush.msra.mxu0 0.0
        %201 = vmatpush.msra.mxu0 0.0
        %202 = vmatpush.msra.mxu0 0.0
        %203 = vmatpush.msra.mxu0 %v180
        %204 = vmatmul.f32.gmra.mxu0 %v186
        %v205 = vpop.f32.mrf.mxu0
        %v206 = vadd.f32 0.0, %v205
        %207 = vdwg.mxu0
        %208 = vmatpush.msra.mxu0 0.0
        %209 = vmatpush.msra.mxu0 0.0
        %210 = vmatpush.msra.mxu0 0.0
        %211 = vmatpush.msra.mxu0 0.0
        %212 = vmatpush.msra.mxu0 0.0
        %213 = vmatpush.msra.mxu0 0.0
        %214 = vmatpush.msra.mxu0 0.0
        %215 = vmatpush.msra.mxu0 0.0
        %216 = vmatpush.msra.mxu0 0.0
        %217 = vmatpush.msra.mxu0 0.0
        %218 = vmatpush.msra.mxu0 0.0
        %219 = vmatpush.msra.mxu0 0.0
        %220 = vmatpush.msra.mxu0 0.0
        %221 = vmatpush.msra.mxu0 0.0
        %222 = vmatpush.msra.mxu0 0.0
        %223 = vmatpush.msra.mxu0 %v181
        %224 = vmatmul.f32.gmra.mxu0 %v186
        %v225 = vpop.f32.mrf.mxu0
        %v226 = vadd.f32 0.0, %v225
        %227 = vdwg.mxu0
        %228 = vmatpush.msra.mxu0 0.0
        %229 = vmatpush.msra.mxu0 0.0
        %230 = vmatpush.msra.mxu0 0.0
        %231 = vmatpush.msra.mxu0 0.0
        %232 = vmatpush.msra.mxu0 0.0
        %233 = vmatpush.msra.mxu0 0.0
        %234 = vmatpush.msra.mxu0 0.0
        %235 = vmatpush.msra.mxu0 0.0
        %236 = vmatpush.msra.mxu0 0.0
        %237 = vmatpush.msra.mxu0 0.0
        %238 = vmatpush.msra.mxu0 0.0
        %239 = vmatpush.msra.mxu0 0.0
        %240 = vmatpush.msra.mxu0 0.0
        %241 = vmatpush.msra.mxu0 0.0
        %242 = vmatpush.msra.mxu0 0.0
        %243 = vmatpush.msra.mxu0 %v182
        %244 = vmatmul.f32.gmra.mxu0 %v186
        %v245 = vpop.f32.mrf.mxu0
        %v246 = vadd.f32 0.0, %v245
        %247 = vdwg.mxu0
        %248 = vmatpush.msra.mxu0 0.0
        %249 = vmatpush.msra.mxu0 0.0
        %250 = vmatpush.msra.mxu0 0.0
        %251 = vmatpush.msra.mxu0 0.0
        %252 = vmatpush.msra.mxu0 0.0
        %253 = vmatpush.msra.mxu0 0.0
        %254 = vmatpush.msra.mxu0 0.0
        %255 = vmatpush.msra.mxu0 0.0
        %256 = vmatpush.msra.mxu0 0.0
        %257 = vmatpush.msra.mxu0 0.0
        %258 = vmatpush.msra.mxu0 0.0
        %259 = vmatpush.msra.mxu0 0.0
        %260 = vmatpush.msra.mxu0 0.0
        %261 = vmatpush.msra.mxu0 0.0
        %262 = vmatpush.msra.mxu0 0.0
        %263 = vmatpush.msra.mxu0 %v183
        %264 = vmatmul.f32.gmra.mxu0 %v186
        %v265 = vpop.f32.mrf.mxu0
        %v266 = vadd.f32 0.0, %v265
        %267 = vdwg.mxu0
        %268 = vst [vmem:[%s176] sm:$0xff] %v206
        %269 = vst [vmem:[%s176 + $0x8] sm:$0xff] %v226
        %270 = vst [vmem:[%s176 + $0x10] sm:$0xff] %v246
        %271 = vst [vmem:[%s176 + $0x18] sm:$0xff] %v266
        %s272 = sand.u32 %s75, 1
        %s273 = scalar_lea.sflag [#allocation4], %s272
        %s274 = sand.u32 %s75, 1
        %s275 = smul.addr %s274, 32
        %s276 = scalar_lea.vmem [#allocation7], %s275
        // Predicated region
        $region37: #{tpu_custom_call.1} parent=27 // pred_check
          %p277 = pneg %p85
        $region38: #{tpu_custom_call.1} parent=27 // pred_check_branch
          %279 = sbr.rel (%p277) target = $region40
        $region39: #{tpu_custom_call.1} parent=27 // pred_region
          %s280 = smul.u32 4, %s20
          %282 = vsyncadd %s273, 0
          %s283 = smul.addr %s280, 8
          %s284 = scalar_lea.hbm %s2, %s283
          %s286 = sshll.u32 %s276, 4
          %s287 = int_to_ptr.vmem [resolvable:$true] %s286
          %s288 = sshll.u32 %s284, 4
          %s289 = int_to_ptr.hbm [resolvable:$true] %s288
          %291 = dma.vmem_to_hbm [thread:$0]  %s287, 512, %s289, %s273
        $region40: #{tpu_custom_call.1} parent=27 // pred_fallthru
          _
      $region28: #{tpu_custom_call.1} parent=5 // pred_fallthru
        _
      %p292 = scmp.le.s32.totalorder 2, %s15
      // Predicated region
      $region41: #{tpu_custom_call.1} parent=5 // pred_check
        %p293 = pneg %p292
      $region42: #{tpu_custom_call.1} parent=5 // pred_check_branch
        %295 = sbr.rel (%p293) target = $region44
      $region43: #{tpu_custom_call.1} parent=5 // pred_region
        %s296 = ssub.s32 %s15, 2
        // Predicated region
        $region45: #{tpu_custom_call.1} parent=43 // pred_check
          %p297 = pneg %p91
        $region46: #{tpu_custom_call.1} parent=43 // pred_check_branch
          %299 = sbr.rel (%p297) target = $region48
        $region47: #{tpu_custom_call.1} parent=43 // pred_region
          %s300 = sand.u32 %s76, 1
          %s301 = scalar_lea.sflag [#allocation4], %s300
          %s302 = sand.u32 %s76, 1
          %s303 = smul.addr %s302, 32
          %s304 = scalar_lea.vmem [#allocation7], %s303
          %306 = dma.done %s301, 512
        $region48: #{tpu_custom_call.1} parent=43 // pred_fallthru
          _
      $region44: #{tpu_custom_call.1} parent=5 // pred_fallthru
        _
    $region6: #{tpu_custom_call.1} parent=1 // loop_footer
      %s19 = sadd.s32 1, %s15
    $region7: #{tpu_custom_call.1} parent=1 // loop_footer_branch
      %14 = sbr.rel target = $region3
    $region8: #{tpu_custom_call.1} parent=1 // loop_exit
      _
    %307 = vsyncpa [#allocation3], 1
    %s308 = scalar_lea.sflag [#allocation3], 1
    %309 = vsyncpa %s308, 1
    %310 = vsyncpa [#allocation6], 1
    %s311 = scalar_lea.sflag [#allocation6], 1
    %312 = vsyncpa %s311, 1
    %313 = vsyncpa [#allocation4], 1
    %s314 = scalar_lea.sflag [#allocation4], 1
    %315 = vsyncpa %s314, 1

</llo_original>
